<compile_context>
chip_gen: v5e
topology: v5e:2x2
jax: 0.10.0
libtpu: 0.0.40
codegen_flags: <defaults>
</compile_context>

<pallas_src>
import functools

import jax
import jax.numpy as jnp
from jax.experimental import pallas as pl
from jax.experimental.pallas import tpu as pltpu

IN_F = 85      # input features
H1 = 256
H2 = 128
OUT_F = 83     # output features
BN_EPS = 1e-5
TILE_B = 512   # batch tile (sweet spot per roofline; clamped to B if smaller)


def _mlp_kernel(x_ref, w1_ref, b1_ref, w2_ref, b2_ref, w3_ref, b3_ref, o_ref):
    # layer1: Linear (BN folded into w1/b1) + ReLU
    h1 = jnp.dot(x_ref[...], w1_ref[...],
                 preferred_element_type=jnp.float32) + b1_ref[...]
    h1 = jnp.maximum(h1, 0.0)
    # layer2: Linear (BN folded into w2/b2) + ReLU
    h2 = jnp.dot(h1.astype(w2_ref.dtype), w2_ref[...],
                 preferred_element_type=jnp.float32) + b2_ref[...]
    h2 = jnp.maximum(h2, 0.0)
    # decoder: Linear
    o_ref[...] = (jnp.dot(h2.astype(w3_ref.dtype), w3_ref[...],
                          preferred_element_type=jnp.float32)
                  + b3_ref[...]).astype(o_ref.dtype)


@functools.partial(jax.jit, static_argnames=("use_bf16", "tile_b"))
def mlp_forward(x, params, *, use_bf16=True, tile_b=TILE_B):
    """x: (B, 85) float32 -> (B, 83) float32."""
    B = x.shape[0]
    tile_b = min(tile_b, B)
    grid = (pl.cdiv(B, tile_b),)

    (w1, b1, g1, be1, m1, v1,
     w2, b2, g2, be2, m2, v2,
     w3, b3) = params

    # Fold eval-mode BatchNorm into the weights / biases.
    s1 = g1 / jnp.sqrt(v1 + BN_EPS)
    s2 = g2 / jnp.sqrt(v2 + BN_EPS)
    w1_f = w1 * s1[None, :]
    b1_f = (b1 - m1) * s1 + be1
    w2_f = w2 * s2[None, :]
    b2_f = (b2 - m2) * s2 + be2

    mm_dtype = jnp.bfloat16 if use_bf16 else jnp.float32
    x_in = x.astype(mm_dtype)
    w1_f = w1_f.astype(mm_dtype)
    w2_f = w2_f.astype(mm_dtype)
    w3_c = w3.astype(mm_dtype)

    # Per-feature biases as (1, N) rows for lane-wise broadcast in-kernel.
    row = lambda v: v.reshape(1, -1).astype(jnp.float32)

    const = lambda shape: pl.BlockSpec(shape, lambda i: (0, 0))

    out = pl.pallas_call(
        _mlp_kernel,
        out_shape=jax.ShapeDtypeStruct((B, OUT_F), jnp.float32),
        grid=grid,
        in_specs=[
            pl.BlockSpec((tile_b, IN_F), lambda i: (i, 0)),   # x tile
            const((IN_F, H1)),                                # w1 (resident)
            const((1, H1)),                                   # b1
            const((H1, H2)),                                  # w2
            const((1, H2)),                                   # b2
            const((H2, OUT_F)),                               # w3
            const((1, OUT_F)),                                # b3
        ],
        out_specs=pl.BlockSpec((tile_b, OUT_F), lambda i: (i, 0)),
        compiler_params=pltpu.CompilerParams(
            dimension_semantics=("parallel",)),
    )(x_in, w1_f, row(b1_f), w2_f, row(b2_f), w3_c, row(b3))

    return out


def init_params(key):
    """Deterministic synthetic parameters matching the PyTorch module shapes."""
    ks = jax.random.split(key, 10)

    def linear(kw, kb, fan_in, fan_out):
        bound = 1.0 / jnp.sqrt(fan_in)
        w = jax.random.uniform(kw, (fan_in, fan_out), jnp.float32, -bound, bound)
        b = jax.random.uniform(kb, (fan_out,), jnp.float32, -bound, bound)
        return w, b

    w1, b1 = linear(ks[0], ks[1], IN_F, H1)
    w2, b2 = linear(ks[2], ks[3], H1, H2)
    w3, b3 = linear(ks[4], ks[5], H2, OUT_F)

    # BatchNorm params (nontrivial, deterministic): gamma, beta, running mean/var.
    g1 = 1.0 + 0.1 * jax.random.normal(ks[6], (H1,), jnp.float32)
    be1 = 0.1 * jax.random.normal(ks[7], (H1,), jnp.float32)
    m1 = 0.05 * jax.random.normal(ks[8], (H1,), jnp.float32)
    v1 = 1.0 + 0.1 * jax.random.uniform(ks[9], (H1,), jnp.float32)

    g2 = 1.0 + 0.1 * jax.random.normal(jax.random.fold_in(key, 100), (H2,), jnp.float32)
    be2 = 0.1 * jax.random.normal(jax.random.fold_in(key, 101), (H2,), jnp.float32)
    m2 = 0.05 * jax.random.normal(jax.random.fold_in(key, 102), (H2,), jnp.float32)
    v2 = 1.0 + 0.1 * jax.random.uniform(jax.random.fold_in(key, 103), (H2,), jnp.float32)

    return (w1, b1, g1, be1, m1, v1,
            w2, b2, g2, be2, m2, v2,
            w3, b3)


def reference_forward(x, params):
    (w1, b1, g1, be1, m1, v1,
     w2, b2, g2, be2, m2, v2,
     w3, b3) = params
    h = x @ w1 + b1
    h = (h - m1) / jnp.sqrt(v1 + BN_EPS) * g1 + be1
    h = jnp.maximum(h, 0.0)
    h = h @ w2 + b2
    h = (h - m2) / jnp.sqrt(v2 + BN_EPS) * g2 + be2
    h = jnp.maximum(h, 0.0)
    return h @ w3 + b3


if __name__ == "__main__":
    key = jax.random.PRNGKey(0)
    params = init_params(key)

    B = 64  # small test batch (any B works; tiles are clamped / partial-block handled)
    x = jax.random.normal(jax.random.fold_in(key, 999), (B, IN_F), jnp.float32)

    y_ref = reference_forward(x, params)

    # Full-precision path: tight tolerance.
    y32 = mlp_forward(x, params, use_bf16=False)
    jax.block_until_ready(y32)
    assert y32.shape == (B, OUT_F)
    assert jnp.allclose(y32, y_ref, atol=1e-4, rtol=1e-4), "f32 path mismatch vs reference"

    # bf16-matmul path (default, MXU-friendly): looser tolerance.
    y16 = mlp_forward(x, params)
    jax.block_until_ready(y16)
    assert y16.shape == (B, OUT_F)
    assert jnp.allclose(y16, y_ref, atol=5e-2, rtol=5e-2), "bf16 path mismatch vs reference"

    print("KERNEL_OK")
</pallas_src>

<mosaic_0001>
module attributes {stable_mosaic.version = 11 : i64} {
  func.func @_mlp_kernel(%arg0: i32, %arg1: memref<64x85xf32, #tpu.memory_space<vmem>>, %arg2: memref<85x256xf32, #tpu.memory_space<vmem>>, %arg3: memref<1x256xf32, #tpu.memory_space<vmem>>, %arg4: memref<256x128xf32, #tpu.memory_space<vmem>>, %arg5: memref<1x128xf32, #tpu.memory_space<vmem>>, %arg6: memref<128x83xf32, #tpu.memory_space<vmem>>, %arg7: memref<1x83xf32, #tpu.memory_space<vmem>>, %arg8: memref<64x83xf32, #tpu.memory_space<vmem>>) attributes {dimension_semantics = [#tpu.dimension_semantics<parallel>], iteration_bounds = array<i64: 1>, scalar_prefetch = 0 : i64, scratch_operands = 0 : i64, tpu.core_type = #tpu.core_type<tc>, window_params = [{transform_indices = @transform_0, window_bounds = array<i64: 64, 85>}, {pipeline_mode = #tpu.pipeline_mode<synchronous>, transform_indices = @transform_1, window_bounds = array<i64: 85, 256>}, {pipeline_mode = #tpu.pipeline_mode<synchronous>, transform_indices = @transform_2, window_bounds = array<i64: 1, 256>}, {pipeline_mode = #tpu.pipeline_mode<synchronous>, transform_indices = @transform_3, window_bounds = array<i64: 256, 128>}, {pipeline_mode = #tpu.pipeline_mode<synchronous>, transform_indices = @transform_4, window_bounds = array<i64: 1, 128>}, {pipeline_mode = #tpu.pipeline_mode<synchronous>, transform_indices = @transform_5, window_bounds = array<i64: 128, 83>}, {pipeline_mode = #tpu.pipeline_mode<synchronous>, transform_indices = @transform_6, window_bounds = array<i64: 1, 83>}, {transform_indices = @transform_7, window_bounds = array<i64: 64, 83>}]} {
    %c0 = arith.constant 0 : index
    %c0_0 = arith.constant 0 : index
    %0 = vector.load %arg1[%c0, %c0_0] : memref<64x85xf32, #tpu.memory_space<vmem>>, vector<64x85xf32>
    %c0_1 = arith.constant 0 : index
    %c0_2 = arith.constant 0 : index
    %1 = vector.load %arg2[%c0_1, %c0_2] : memref<85x256xf32, #tpu.memory_space<vmem>>, vector<85x256xf32>
    %cst = arith.constant dense<0.000000e+00> : vector<64x256xf32>
    %2 = tpu.matmul %0, %1, %cst {dimension_numbers = #tpu.dot_dimension_numbers<[1], [0], [0], [1], [0, 0, 1, 1], [], []>} : vector<64x85xf32>, vector<85x256xf32>, vector<64x256xf32> -> vector<64x256xf32>
    %c0_3 = arith.constant 0 : index
    %c0_4 = arith.constant 0 : index
    %3 = vector.load %arg3[%c0_3, %c0_4] : memref<1x256xf32, #tpu.memory_space<vmem>>, vector<1x256xf32>
    %4 = vector.broadcast %3 : vector<1x256xf32> to vector<64x256xf32>
    %5 = arith.addf %2, %4 : vector<64x256xf32>
    %cst_5 = arith.constant 0.000000e+00 : f32
    %6 = vector.broadcast %cst_5 : f32 to vector<64x256xf32>
    %7 = arith.maximumf %5, %6 : vector<64x256xf32>
    %c0_6 = arith.constant 0 : index
    %c0_7 = arith.constant 0 : index
    %8 = vector.load %arg4[%c0_6, %c0_7] : memref<256x128xf32, #tpu.memory_space<vmem>>, vector<256x128xf32>
    %cst_8 = arith.constant dense<0.000000e+00> : vector<64x128xf32>
    %9 = tpu.matmul %7, %8, %cst_8 {dimension_numbers = #tpu.dot_dimension_numbers<[1], [0], [0], [1], [0, 0, 1, 1], [], []>} : vector<64x256xf32>, vector<256x128xf32>, vector<64x128xf32> -> vector<64x128xf32>
    %c0_9 = arith.constant 0 : index
    %c0_10 = arith.constant 0 : index
    %10 = vector.load %arg5[%c0_9, %c0_10] : memref<1x128xf32, #tpu.memory_space<vmem>>, vector<1x128xf32>
    %11 = vector.broadcast %10 : vector<1x128xf32> to vector<64x128xf32>
    %12 = arith.addf %9, %11 : vector<64x128xf32>
    %cst_11 = arith.constant 0.000000e+00 : f32
    %13 = vector.broadcast %cst_11 : f32 to vector<64x128xf32>
    %14 = arith.maximumf %12, %13 : vector<64x128xf32>
    %c0_12 = arith.constant 0 : index
    %c0_13 = arith.constant 0 : index
    %15 = vector.load %arg6[%c0_12, %c0_13] : memref<128x83xf32, #tpu.memory_space<vmem>>, vector<128x83xf32>
    %cst_14 = arith.constant dense<0.000000e+00> : vector<64x83xf32>
    %16 = tpu.matmul %14, %15, %cst_14 {dimension_numbers = #tpu.dot_dimension_numbers<[1], [0], [0], [1], [0, 0, 1, 1], [], []>} : vector<64x128xf32>, vector<128x83xf32>, vector<64x83xf32> -> vector<64x83xf32>
    %c0_15 = arith.constant 0 : index
    %c0_16 = arith.constant 0 : index
    %17 = vector.load %arg7[%c0_15, %c0_16] : memref<1x83xf32, #tpu.memory_space<vmem>>, vector<1x83xf32>
    %18 = vector.broadcast %17 : vector<1x83xf32> to vector<64x83xf32>
    %19 = arith.addf %16, %18 : vector<64x83xf32>
    %c0_17 = arith.constant 0 : index
    %c0_18 = arith.constant 0 : index
    %20 = vector.load %arg8[%c0_17, %c0_18] : memref<64x83xf32, #tpu.memory_space<vmem>>, vector<64x83xf32>
    tpu.vector_store %arg8[%c0_17, %c0_18], %19 {strides = array<i32>} : memref<64x83xf32, #tpu.memory_space<vmem>>, vector<64x83xf32>,
    return
  }
  func.func @transform_0(%arg0: i32) -> (i32, i32) {
    %c0_i32 = arith.constant 0 : i32
    %c0_i32_0 = arith.constant 0 : i32
    return %arg0, %c0_i32 : i32, i32
  }
  func.func @transform_1(%arg0: i32) -> (i32, i32) {
    %c0_i32 = arith.constant 0 : i32
    %c0_i32_0 = arith.constant 0 : i32
    %c0_i32_1 = arith.constant 0 : i32
    return %c0_i32, %c0_i32_0 : i32, i32
  }
  func.func @transform_2(%arg0: i32) -> (i32, i32) {
    %c0_i32 = arith.constant 0 : i32
    %c0_i32_0 = arith.constant 0 : i32
    %c0_i32_1 = arith.constant 0 : i32
    return %c0_i32, %c0_i32_0 : i32, i32
  }
  func.func @transform_3(%arg0: i32) -> (i32, i32) {
    %c0_i32 = arith.constant 0 : i32
    %c0_i32_0 = arith.constant 0 : i32
    %c0_i32_1 = arith.constant 0 : i32
    return %c0_i32, %c0_i32_0 : i32, i32
  }
  func.func @transform_4(%arg0: i32) -> (i32, i32) {
    %c0_i32 = arith.constant 0 : i32
    %c0_i32_0 = arith.constant 0 : i32
    %c0_i32_1 = arith.constant 0 : i32
    return %c0_i32, %c0_i32_0 : i32, i32
  }
  func.func @transform_5(%arg0: i32) -> (i32, i32) {
    %c0_i32 = arith.constant 0 : i32
    %c0_i32_0 = arith.constant 0 : i32
    %c0_i32_1 = arith.constant 0 : i32
    return %c0_i32, %c0_i32_0 : i32, i32
  }
  func.func @transform_6(%arg0: i32) -> (i32, i32) {
    %c0_i32 = arith.constant 0 : i32
    %c0_i32_0 = arith.constant 0 : i32
    %c0_i32_1 = arith.constant 0 : i32
    return %c0_i32, %c0_i32_0 : i32, i32
  }
  func.func @transform_7(%arg0: i32) -> (i32, i32) {
    %c0_i32 = arith.constant 0 : i32
    %c0_i32_0 = arith.constant 0 : i32
    return %arg0, %c0_i32 : i32, i32
  }
}

</mosaic_0001>

<llo_original>
// kernel: mlp_forward.1
$region0: #{mlp_forward.1}
  #allocation0 [shape = 'u32[]', space=smem, size = 0x4, offset = 0x4, fixed_abs, tag = 'smem constant byte address 0x4 - core index']
  #allocation1 [shape = 'u32[72,128]{1,0:T(1,128)}', space=vmem, size = 0x9000, scoped, tag = 'internal scratch']
  %s0 = inlined_call_operand.vmem [shape: f32[64,85], index: 0, kind: input, shape index: {}]
  %s1 = inlined_call_operand.vmem [shape: f32[85,256], index: 1, kind: input, shape index: {}]
  %s2 = inlined_call_operand.vmem [shape: f32[1,256], index: 2, kind: input, shape index: {}]
  %s3 = inlined_call_operand.vmem [shape: f32[256,128], index: 3, kind: input, shape index: {}]
  %s4 = inlined_call_operand.vmem [shape: f32[1,128], index: 4, kind: input, shape index: {}]
  %s5 = inlined_call_operand.vmem [shape: f32[128,83], index: 5, kind: input, shape index: {}]
  %s6 = inlined_call_operand.vmem [shape: f32[1,83], index: 6, kind: input, shape index: {}]
  %s7 = inlined_call_operand.hbm [shape: f32[64,83], index: 7, kind: output, shape index: {}]
  %s8 = sld [smem:[#allocation0]]
  $region38: #{mlp_forward.1} parent=0
    _
  %s10 = ssub.s32 1, %s8
  %s11 = scalar_select 0, %s10, %s8
  $region1: #{mlp_forward.1} parent=0
    #allocation2 [shape = 'u8[32768]{0}', space=vmem, size = 0x8000, scoped, tag = 'output window, operand 0, single buffered']
    #allocation3 [shape = 's32[1]{0}', space=sflag, size = 0x4, scoped, tag = 'scoped memory for mlp_forward.1']
    %12 = vsyncpa [#allocation3], 0
    // Predicated region
    $region2: #{mlp_forward.1} parent=1 // pred_check
      _
    $region3: #{mlp_forward.1} parent=1 // pred_check_branch
      %14 = sbr.rel (0) target = $region5
    $region4: #{mlp_forward.1} parent=1 // pred_region
      _
    $region5: #{mlp_forward.1} parent=1 // pred_fallthru
      _
    // Predicated region
    $region6: #{mlp_forward.1} parent=1 // pred_check
      _
    $region7: #{mlp_forward.1} parent=1 // pred_check_branch
      %16 = sbr.rel (0) target = $region9
    $region8: #{mlp_forward.1} parent=1 // pred_region
      _
    $region9: #{mlp_forward.1} parent=1 // pred_fallthru
      _
    // Predicated region
    $region10: #{mlp_forward.1} parent=1 // pred_check
      _
    $region11: #{mlp_forward.1} parent=1 // pred_check_branch
      %18 = sbr.rel (0) target = $region13
    $region12: #{mlp_forward.1} parent=1 // pred_region
      _
    $region13: #{mlp_forward.1} parent=1 // pred_fallthru
      _
    // Predicated region
    $region14: #{mlp_forward.1} parent=1 // pred_check
      _
    $region15: #{mlp_forward.1} parent=1 // pred_check_branch
      %20 = sbr.rel (0) target = $region17
    $region16: #{mlp_forward.1} parent=1 // pred_region
      _
    $region17: #{mlp_forward.1} parent=1 // pred_fallthru
      _
    // Predicated region
    $region18: #{mlp_forward.1} parent=1 // pred_check
      _
    $region19: #{mlp_forward.1} parent=1 // pred_check_branch
      %22 = sbr.rel (0) target = $region21
    $region20: #{mlp_forward.1} parent=1 // pred_region
      _
    $region21: #{mlp_forward.1} parent=1 // pred_fallthru
      _
    // Predicated region
    $region22: #{mlp_forward.1} parent=1 // pred_check
      _
    $region23: #{mlp_forward.1} parent=1 // pred_check_branch
      %24 = sbr.rel (0) target = $region25
    $region24: #{mlp_forward.1} parent=1 // pred_region
      _
    $region25: #{mlp_forward.1} parent=1 // pred_fallthru
      _
    // Predicated region
    $region26: #{mlp_forward.1} parent=1 // pred_check
      _
    $region27: #{mlp_forward.1} parent=1 // pred_check_branch
      %26 = sbr.rel (0) target = $region29
    $region28: #{mlp_forward.1} parent=1 // pred_region
      _
    $region29: #{mlp_forward.1} parent=1 // pred_fallthru
      _
    %v27 = vld [vmem:[%s0] sm:$0xff]
    %v28 = vld [vmem:[%s0 + $0x8] sm:$0xff]
    %v29 = vld [vmem:[%s0 + $0x10] sm:$0xff]
    %v30 = vld [vmem:[%s0 + $0x18] sm:$0xff]
    %v31 = vld [vmem:[%s0 + $0x20] sm:$0xff]
    %v32 = vld [vmem:[%s0 + $0x28] sm:$0xff]
    %v33 = vld [vmem:[%s0 + $0x30] sm:$0xff]
    %v34 = vld [vmem:[%s0 + $0x38] sm:$0xff]
    %v35 = vld [vmem:[%s1] sm:$0xff]
    %v36 = vld [vmem:[%s1 + $0x8] sm:$0xff]
    %v37 = vld [vmem:[%s1 + $0x10] sm:$0xff]
    %v38 = vld [vmem:[%s1 + $0x18] sm:$0xff]
    %v39 = vld [vmem:[%s1 + $0x20] sm:$0xff]
    %v40 = vld [vmem:[%s1 + $0x28] sm:$0xff]
    %v41 = vld [vmem:[%s1 + $0x30] sm:$0xff]
    %v42 = vld [vmem:[%s1 + $0x38] sm:$0xff]
    %v43 = vld [vmem:[%s1 + $0x40] sm:$0xff]
    %v44 = vld [vmem:[%s1 + $0x48] sm:$0xff]
    %v45 = vld [vmem:[%s1 + $0x50] sm:$0xff]
    %v46 = vld [vmem:[%s1 + $0x58] sm:$0xff]
    %v47 = vld [vmem:[%s1 + $0x60] sm:$0xff]
    %v48 = vld [vmem:[%s1 + $0x68] sm:$0xff]
    %v49 = vld [vmem:[%s1 + $0x70] sm:$0xff]
    %v50 = vld [vmem:[%s1 + $0x78] sm:$0xff]
    %v51 = vld [vmem:[%s1 + $0x80] sm:$0xff]
    %v52 = vld [vmem:[%s1 + $0x88] sm:$0xff]
    %v53 = vld [vmem:[%s1 + $0x90] sm:$0xff]
    %v54 = vld [vmem:[%s1 + $0x98] sm:$0xff]
    %v55 = vld [vmem:[%s1 + $0xa0] sm:$0x1f]
    %v56 = vld [vmem:[%s1 + $0xa8] sm:$0x1f]
    %v57 = vld [vmem:[%s2] sm:$0x3]
    %v59 = vperm.slane %v57, 0
    %v60 = vperm.slane %v57, 1
    %vm63 = vcmask 695296
    %v65 = vsel %vm63, %v27, 0
    %v68 = vsel %vm63, %v28, 0
    %v71 = vsel %vm63, %v29, 0
    %v74 = vsel %vm63, %v30, 0
    %v77 = vsel %vm63, %v31, 0
    %v80 = vsel %vm63, %v32, 0
    %v83 = vsel %vm63, %v33, 0
    %v86 = vsel %vm63, %v34, 0
    %vm88 = vcmask 1044480
    %v90 = vsel %vm88, %v55, 0
    %v93 = vsel %vm88, %v56, 0
    %95 = vmatpush.msra.mxu0 0.0
    %96 = vmatpush.msra.mxu0 0.0
    %97 = vmatpush.msra.mxu0 0.0
    %98 = vmatpush.msra.mxu0 0.0
    %99 = vmatpush.msra.mxu0 0.0
    %100 = vmatpush.msra.mxu0 %v90
    %101 = vmatpush.msra.mxu0 %v53
    %102 = vmatpush.msra.mxu0 %v51
    %103 = vmatpush.msra.mxu0 %v49
    %104 = vmatpush.msra.mxu0 %v47
    %105 = vmatpush.msra.mxu0 %v45
    %106 = vmatpush.msra.mxu0 %v43
    %107 = vmatpush.msra.mxu0 %v41
    %108 = vmatpush.msra.mxu0 %v39
    %109 = vmatpush.msra.mxu0 %v37
    %110 = vmatpush.msra.mxu0 %v35
    %111 = vmatmul.f32.gmra.mxu0 %v65
    %v112 = vpop.f32.mrf.mxu0
    %v113 = vadd.f32 %v59, %v112
    %114 = vmatmul.f32.gmra.mxu0 %v68
    %v115 = vpop.f32.mrf.mxu0
    %v116 = vadd.f32 %v59, %v115
    %117 = vmatmul.f32.gmra.mxu0 %v71
    %v118 = vpop.f32.mrf.mxu0
    %v119 = vadd.f32 %v59, %v118
    %120 = vmatmul.f32.gmra.mxu0 %v74
    %v121 = vpop.f32.mrf.mxu0
    %v122 = vadd.f32 %v59, %v121
    %123 = vmatmul.f32.gmra.mxu0 %v77
    %v124 = vpop.f32.mrf.mxu0
    %v125 = vadd.f32 %v59, %v124
    %126 = vmatmul.f32.gmra.mxu0 %v80
    %v127 = vpop.f32.mrf.mxu0
    %v128 = vadd.f32 %v59, %v127
    %129 = vmatmul.f32.gmra.mxu0 %v83
    %v130 = vpop.f32.mrf.mxu0
    %v131 = vadd.f32 %v59, %v130
    %132 = vmatmul.f32.gmra.mxu0 %v86
    %v133 = vpop.f32.mrf.mxu0
    %v134 = vadd.f32 %v59, %v133
    %135 = vdwg.mxu0
    %136 = vmatpush.msra.mxu0 0.0
    %137 = vmatpush.msra.mxu0 0.0
    %138 = vmatpush.msra.mxu0 0.0
    %139 = vmatpush.msra.mxu0 0.0
    %140 = vmatpush.msra.mxu0 0.0
    %141 = vmatpush.msra.mxu0 %v93
    %142 = vmatpush.msra.mxu0 %v54
    %143 = vmatpush.msra.mxu0 %v52
    %144 = vmatpush.msra.mxu0 %v50
    %145 = vmatpush.msra.mxu0 %v48
    %146 = vmatpush.msra.mxu0 %v46
    %147 = vmatpush.msra.mxu0 %v44
    %148 = vmatpush.msra.mxu0 %v42
    %149 = vmatpush.msra.mxu0 %v40
    %150 = vmatpush.msra.mxu0 %v38
    %151 = vmatpush.msra.mxu0 %v36
    %152 = vmatmul.f32.gmra.mxu0 %v65
    %v153 = vpop.f32.mrf.mxu0
    %v154 = vadd.f32 %v60, %v153
    %155 = vmatmul.f32.gmra.mxu0 %v68
    %v156 = vpop.f32.mrf.mxu0
    %v157 = vadd.f32 %v60, %v156
    %158 = vmatmul.f32.gmra.mxu0 %v71
    %v159 = vpop.f32.mrf.mxu0
    %v160 = vadd.f32 %v60, %v159
    %161 = vmatmul.f32.gmra.mxu0 %v74
    %v162 = vpop.f32.mrf.mxu0
    %v163 = vadd.f32 %v60, %v162
    %164 = vmatmul.f32.gmra.mxu0 %v77
    %v165 = vpop.f32.mrf.mxu0
    %v166 = vadd.f32 %v60, %v165
    %167 = vmatmul.f32.gmra.mxu0 %v80
    %v168 = vpop.f32.mrf.mxu0
    %v169 = vadd.f32 %v60, %v168
    %170 = vmatmul.f32.gmra.mxu0 %v83
    %v171 = vpop.f32.mrf.mxu0
    %v172 = vadd.f32 %v60, %v171
    %173 = vmatmul.f32.gmra.mxu0 %v86
    %v174 = vpop.f32.mrf.mxu0
    %v175 = vadd.f32 %v60, %v174
    %176 = vdwg.mxu0
    %v177 = vmax.f32 %v113, 0.0
    %v178 = vmax.f32 %v154, 0.0
    %v179 = vmax.f32 %v116, 0.0
    %v180 = vmax.f32 %v157, 0.0
    %v181 = vmax.f32 %v119, 0.0
    %v182 = vmax.f32 %v160, 0.0
    %v183 = vmax.f32 %v122, 0.0
    %v184 = vmax.f32 %v163, 0.0
    %v185 = vmax.f32 %v125, 0.0
    %v186 = vmax.f32 %v166, 0.0
    %v187 = vmax.f32 %v128, 0.0
    %v188 = vmax.f32 %v169, 0.0
    %v189 = vmax.f32 %v131, 0.0
    %v190 = vmax.f32 %v172, 0.0
    %v191 = vmax.f32 %v134, 0.0
    %v192 = vmax.f32 %v175, 0.0
    %v193 = vld [vmem:[%s3] sm:$0xff]
    %v194 = vld [vmem:[%s3 + $0x8] sm:$0xff]
    %v195 = vld [vmem:[%s3 + $0x10] sm:$0xff]
    %v196 = vld [vmem:[%s3 + $0x18] sm:$0xff]
    %v197 = vld [vmem:[%s3 + $0x20] sm:$0xff]
    %v198 = vld [vmem:[%s3 + $0x28] sm:$0xff]
    %v199 = vld [vmem:[%s3 + $0x30] sm:$0xff]
    %v200 = vld [vmem:[%s3 + $0x38] sm:$0xff]
    %v201 = vld [vmem:[%s3 + $0x40] sm:$0xff]
    %v202 = vld [vmem:[%s3 + $0x48] sm:$0xff]
    %v203 = vld [vmem:[%s3 + $0x50] sm:$0xff]
    %v204 = vld [vmem:[%s3 + $0x58] sm:$0xff]
    %v205 = vld [vmem:[%s3 + $0x60] sm:$0xff]
    %v206 = vld [vmem:[%s3 + $0x68] sm:$0xff]
    %v207 = vld [vmem:[%s3 + $0x70] sm:$0xff]
    %v208 = vld [vmem:[%s3 + $0x78] sm:$0xff]
    %v209 = vld [vmem:[%s3 + $0x80] sm:$0xff]
    %v210 = vld [vmem:[%s3 + $0x88] sm:$0xff]
    %v211 = vld [vmem:[%s3 + $0x90] sm:$0xff]
    %v212 = vld [vmem:[%s3 + $0x98] sm:$0xff]
    %v213 = vld [vmem:[%s3 + $0xa0] sm:$0xff]
    %v214 = vld [vmem:[%s3 + $0xa8] sm:$0xff]
    %v215 = vld [vmem:[%s3 + $0xb0] sm:$0xff]
    %v216 = vld [vmem:[%s3 + $0xb8] sm:$0xff]
    %v217 = vld [vmem:[%s3 + $0xc0] sm:$0xff]
    %v218 = vld [vmem:[%s3 + $0xc8] sm:$0xff]
    %v219 = vld [vmem:[%s3 + $0xd0] sm:$0xff]
    %v220 = vld [vmem:[%s3 + $0xd8] sm:$0xff]
    %v221 = vld [vmem:[%s3 + $0xe0] sm:$0xff]
    %v222 = vld [vmem:[%s3 + $0xe8] sm:$0xff]
    %v223 = vld [vmem:[%s3 + $0xf0] sm:$0xff]
    %v224 = vld [vmem:[%s3 + $0xf8] sm:$0xff]
    %v225 = vld [vmem:[%s4] sm:$0x1]
    %v227 = vperm.slane %v225, 0
    %229 = vmatpush.msra.mxu0 %v208
    %230 = vmatpush.msra.mxu0 %v207
    %231 = vmatpush.msra.mxu0 %v206
    %232 = vmatpush.msra.mxu0 %v205
    %233 = vmatpush.msra.mxu0 %v204
    %234 = vmatpush.msra.mxu0 %v203
    %235 = vmatpush.msra.mxu0 %v202
    %236 = vmatpush.msra.mxu0 %v201
    %237 = vmatpush.msra.mxu0 %v200
    %238 = vmatpush.msra.mxu0 %v199
    %239 = vmatpush.msra.mxu0 %v198
    %240 = vmatpush.msra.mxu0 %v197
    %241 = vmatpush.msra.mxu0 %v196
    %242 = vmatpush.msra.mxu0 %v195
    %243 = vmatpush.msra.mxu0 %v194
    %244 = vmatpush.msra.mxu0 %v193
    %245 = vmatmul.f32.gmra.mxu0 %v177
    %v246 = vpop.f32.mrf.mxu0
    %v247 = vadd.f32 %v227, %v246
    %248 = vmatmul.f32.gmra.mxu0 %v179
    %v249 = vpop.f32.mrf.mxu0
    %v250 = vadd.f32 %v227, %v249
    %251 = vmatmul.f32.gmra.mxu0 %v181
    %v252 = vpop.f32.mrf.mxu0
    %v253 = vadd.f32 %v227, %v252
    %254 = vmatmul.f32.gmra.mxu0 %v183
    %v255 = vpop.f32.mrf.mxu0
    %v256 = vadd.f32 %v227, %v255
    %257 = vmatmul.f32.gmra.mxu0 %v185
    %v258 = vpop.f32.mrf.mxu0
    %v259 = vadd.f32 %v227, %v258
    %260 = vmatmul.f32.gmra.mxu0 %v187
    %v261 = vpop.f32.mrf.mxu0
    %v262 = vadd.f32 %v227, %v261
    %263 = vmatmul.f32.gmra.mxu0 %v189
    %v264 = vpop.f32.mrf.mxu0
    %v265 = vadd.f32 %v227, %v264
    %266 = vmatmul.f32.gmra.mxu0 %v191
    %v267 = vpop.f32.mrf.mxu0
    %v268 = vadd.f32 %v227, %v267
    %269 = vdwg.mxu0
    %270 = vmatpush.msra.mxu0 %v224
    %271 = vmatpush.msra.mxu0 %v223
    %272 = vmatpush.msra.mxu0 %v222
    %273 = vmatpush.msra.mxu0 %v221
    %274 = vmatpush.msra.mxu0 %v220
    %275 = vmatpush.msra.mxu0 %v219
    %276 = vmatpush.msra.mxu0 %v218
    %277 = vmatpush.msra.mxu0 %v217
    %278 = vmatpush.msra.mxu0 %v216
    %279 = vmatpush.msra.mxu0 %v215
    %280 = vmatpush.msra.mxu0 %v214
    %281 = vmatpush.msra.mxu0 %v213
    %282 = vmatpush.msra.mxu0 %v212
    %283 = vmatpush.msra.mxu0 %v211
    %284 = vmatpush.msra.mxu0 %v210
    %285 = vmatpush.msra.mxu0 %v209
    %286 = vmatmul.f32.gmra.mxu0 %v178
    %v287 = vpop.f32.mrf.mxu0
    %v288 = vadd.f32 %v247, %v287
    %289 = vmatmul.f32.gmra.mxu0 %v180
    %v290 = vpop.f32.mrf.mxu0
    %v291 = vadd.f32 %v250, %v290
    %292 = vmatmul.f32.gmra.mxu0 %v182
    %v293 = vpop.f32.mrf.mxu0
    %v294 = vadd.f32 %v253, %v293
    %295 = vmatmul.f32.gmra.mxu0 %v184
    %v296 = vpop.f32.mrf.mxu0
    %v297 = vadd.f32 %v256, %v296
    %298 = vmatmul.f32.gmra.mxu0 %v186
    %v299 = vpop.f32.mrf.mxu0
    %v300 = vadd.f32 %v259, %v299
    %301 = vmatmul.f32.gmra.mxu0 %v188
    %v302 = vpop.f32.mrf.mxu0
    %v303 = vadd.f32 %v262, %v302
    %304 = vmatmul.f32.gmra.mxu0 %v190
    %v305 = vpop.f32.mrf.mxu0
    %v306 = vadd.f32 %v265, %v305
    %307 = vmatmul.f32.gmra.mxu0 %v192
    %v308 = vpop.f32.mrf.mxu0
    %v309 = vadd.f32 %v268, %v308
    %310 = vdwg.mxu0
    %v311 = vmax.f32 %v288, 0.0
    %v312 = vmax.f32 %v291, 0.0
    %v313 = vmax.f32 %v294, 0.0
    %v314 = vmax.f32 %v297, 0.0
    %v315 = vmax.f32 %v300, 0.0
    %v316 = vmax.f32 %v303, 0.0
    %v317 = vmax.f32 %v306, 0.0
    %v318 = vmax.f32 %v309, 0.0
    %v319 = vld [vmem:[%s5] sm:$0xff]
    %v320 = vld [vmem:[%s5 + $0x8] sm:$0xff]
    %v321 = vld [vmem:[%s5 + $0x10] sm:$0xff]
    %v322 = vld [vmem:[%s5 + $0x18] sm:$0xff]
    %v323 = vld [vmem:[%s5 + $0x20] sm:$0xff]
    %v324 = vld [vmem:[%s5 + $0x28] sm:$0xff]
    %v325 = vld [vmem:[%s5 + $0x30] sm:$0xff]
    %v326 = vld [vmem:[%s5 + $0x38] sm:$0xff]
    %v327 = vld [vmem:[%s5 + $0x40] sm:$0xff]
    %v328 = vld [vmem:[%s5 + $0x48] sm:$0xff]
    %v329 = vld [vmem:[%s5 + $0x50] sm:$0xff]
    %v330 = vld [vmem:[%s5 + $0x58] sm:$0xff]
    %v331 = vld [vmem:[%s5 + $0x60] sm:$0xff]
    %v332 = vld [vmem:[%s5 + $0x68] sm:$0xff]
    %v333 = vld [vmem:[%s5 + $0x70] sm:$0xff]
    %v334 = vld [vmem:[%s5 + $0x78] sm:$0xff]
    %v335 = vld [vmem:[%s6] sm:$0x1]
    %v337 = vperm.slane %v335, 0
    %339 = vmatpush.msra.mxu0 %v334
    %340 = vmatpush.msra.mxu0 %v333
    %341 = vmatpush.msra.mxu0 %v332
    %342 = vmatpush.msra.mxu0 %v331
    %343 = vmatpush.msra.mxu0 %v330
    %344 = vmatpush.msra.mxu0 %v329
    %345 = vmatpush.msra.mxu0 %v328
    %346 = vmatpush.msra.mxu0 %v327
    %347 = vmatpush.msra.mxu0 %v326
    %348 = vmatpush.msra.mxu0 %v325
    %349 = vmatpush.msra.mxu0 %v324
    %350 = vmatpush.msra.mxu0 %v323
    %351 = vmatpush.msra.mxu0 %v322
    %352 = vmatpush.msra.mxu0 %v321
    %353 = vmatpush.msra.mxu0 %v320
    %354 = vmatpush.msra.mxu0 %v319
    %355 = vmatmul.f32.gmra.mxu0 %v311
    %v356 = vpop.f32.mrf.mxu0
    %v357 = vadd.f32 %v337, %v356
    %358 = vmatmul.f32.gmra.mxu0 %v312
    %v359 = vpop.f32.mrf.mxu0
    %v360 = vadd.f32 %v337, %v359
    %361 = vmatmul.f32.gmra.mxu0 %v313
    %v362 = vpop.f32.mrf.mxu0
    %v363 = vadd.f32 %v337, %v362
    %364 = vmatmul.f32.gmra.mxu0 %v314
    %v365 = vpop.f32.mrf.mxu0
    %v366 = vadd.f32 %v337, %v365
    %367 = vmatmul.f32.gmra.mxu0 %v315
    %v368 = vpop.f32.mrf.mxu0
    %v369 = vadd.f32 %v337, %v368
    %370 = vmatmul.f32.gmra.mxu0 %v316
    %v371 = vpop.f32.mrf.mxu0
    %v372 = vadd.f32 %v337, %v371
    %373 = vmatmul.f32.gmra.mxu0 %v317
    %v374 = vpop.f32.mrf.mxu0
    %v375 = vadd.f32 %v337, %v374
    %376 = vmatmul.f32.gmra.mxu0 %v318
    %v377 = vpop.f32.mrf.mxu0
    %v378 = vadd.f32 %v337, %v377
    %379 = vdwg.mxu0
    %vm380 = vcmask 678912
    %381 = vst.msk [vmem:[#allocation2] sm:$0xff] %vm380, %v357
    %382 = vst.msk [vmem:[#allocation2 + $0x8] sm:$0xff] %vm380, %v360
    %383 = vst.msk [vmem:[#allocation2 + $0x10] sm:$0xff] %vm380, %v363
    %384 = vst.msk [vmem:[#allocation2 + $0x18] sm:$0xff] %vm380, %v366
    %385 = vst.msk [vmem:[#allocation2 + $0x20] sm:$0xff] %vm380, %v369
    %386 = vst.msk [vmem:[#allocation2 + $0x28] sm:$0xff] %vm380, %v372
    %387 = vst.msk [vmem:[#allocation2 + $0x30] sm:$0xff] %vm380, %v375
    %388 = vst.msk [vmem:[#allocation2 + $0x38] sm:$0xff] %vm380, %v378
    // Predicated region
    $region30: #{mlp_forward.1} parent=1 // pred_check
      _
    $region31: #{mlp_forward.1} parent=1 // pred_check_branch
      %390 = sbr.rel (0) target = $region33
    $region32: #{mlp_forward.1} parent=1 // pred_region
      %392 = vsyncadd [#allocation3], 0
      %s393 = sshll.u32 [#allocation2], 4
      %s394 = int_to_ptr.vmem [resolvable:$true] %s393
      %s395 = sshll.u32 %s7, 4
      %s396 = int_to_ptr.hbm [resolvable:$true] %s395
      %401 = dma.vmem_to_hbm [thread:$0]  %s394, 1024, %s396, [#allocation3], 128, 128, 8
    $region33: #{mlp_forward.1} parent=1 // pred_fallthru
      _
    // Predicated region
    $region34: #{mlp_forward.1} parent=1 // pred_check
      _
    $region35: #{mlp_forward.1} parent=1 // pred_check_branch
      %403 = sbr.rel (0) target = $region37
    $region36: #{mlp_forward.1} parent=1 // pred_region
      %405 = dma.done [#allocation3], 1024
    $region37: #{mlp_forward.1} parent=1 // pred_fallthru
      _
    %406 = vsyncpa [#allocation3], 1

</llo_original>
